<compile_context>
chip_gen: v5e
topology: v5e:2x2
jax: 0.10.0
libtpu: 0.0.40
codegen_flags: <defaults>
</compile_context>

<pallas_src>
import functools

import jax
import jax.numpy as jnp
from jax.experimental import pallas as pl
from jax.experimental.pallas import tpu as pltpu


# --------------------------------------------------------------------------- #
# Kernels
# --------------------------------------------------------------------------- #
def _scores_kernel(x_ref, w1_ref, b1_ref, w2_ref, o_ref):
    # (16, D) contracted with (TILE_N, D) over D -> (16, TILE_N) on the MXU
    # (transpose-free; each output column depends only on its own x row, so
    #  padded rows of the last grid block cannot contaminate valid scores).
    h = jax.lax.dot_general(
        w1_ref[...], x_ref[...],
        dimension_numbers=(((1,), (1,)), ((), ())),
        preferred_element_type=jnp.float32,
    )
    h = jnp.maximum(h + b1_ref[...], 0.0)            # bias (16,1) bcast + ReLU
    # Dropout(p=0) == identity.
    # 16 -> 1 head on VPU (mul) + XLU (sublane reduce): lane-dense (1, TILE_N).
    # b2 omitted: softmax is invariant to adding a constant to every score.
    o_ref[...] = jnp.sum(h * w2_ref[...], axis=0, keepdims=True)


def _fused_kernel(x_ref, w1_ref, b1_ref, w2_ref, o_ref):
    # Scores (as above) + global softmax, everything resident in VMEM.
    h = jax.lax.dot_general(
        w1_ref[...], x_ref[...],
        dimension_numbers=(((1,), (1,)), ((), ())),
        preferred_element_type=jnp.float32,
    )
    h = jnp.maximum(h + b1_ref[...], 0.0)
    s = jnp.sum(h * w2_ref[...], axis=0, keepdims=True)          # (1, N)
    m = jnp.max(s, axis=1, keepdims=True)
    e = jnp.exp(s - m)
    o_ref[...] = e * pl.reciprocal(jnp.sum(e, axis=1, keepdims=True))


def _softmax_row_kernel(s_ref, o_ref):
    s = s_ref[...]                                    # (1, N), lane-dense
    m = jnp.max(s, axis=1, keepdims=True)
    e = jnp.exp(s - m)
    o_ref[...] = e * pl.reciprocal(jnp.sum(e, axis=1, keepdims=True))


def _softmax_dense_kernel(s_ref, o_ref):
    s = s_ref[...]                                    # (N//128, 128), sublane+lane dense
    m = jnp.max(jnp.max(s, axis=1, keepdims=True), axis=0, keepdims=True)
    e = jnp.exp(s - m)
    den = jnp.sum(jnp.sum(e, axis=1, keepdims=True), axis=0, keepdims=True)
    o_ref[...] = e * pl.reciprocal(den)


# --------------------------------------------------------------------------- #
# VMEM-budget / tile heuristics
# --------------------------------------------------------------------------- #
def _vmem_budget():
    """Usable scoped-VMEM budget (bytes), generation-aware with a safe fallback."""
    cap = None
    try:
        cap = getattr(pltpu.get_tpu_info(), "vmem_capacity_bytes", None)
    except Exception:
        cap = None
    if not cap:
        cap = 64 << 20                      # conservative: v7x per-TensorCore VMEM
    # leave >= 16 MiB headroom; never ask for more than 112 MiB (v5e/v6e have 128)
    return int(min(max(int(cap) - (16 << 20), 16 << 20), 112 << 20))


def _round128_down(v):
    return max(128, (int(v) // 128) * 128)


def _choose_tile(n, d, itemsize, budget, requested=None):
    """Tile for the streamed x block: ~4 MiB/step, VMEM-capped, >= 2 grid steps."""
    if requested is not None:
        t = _round128_down(requested)
    else:
        t = _round128_down((4 << 20) // max(1, d * itemsize))        # ~4 MiB of x / step
    # double-buffered x tile must leave room for weights / outputs / intermediates
    t = min(t, _round128_down(int(budget * 0.4) // max(1, 2 * d * itemsize)))
    # keep >= 2 grid steps (v7x megacore sharding + pipeline overlap) when possible
    if n > 256:
        t = min(t, _round128_down(-(-n // 2)))
    # never larger than the 128-rounded-up token count
    t = min(t, 128 * (-(-n // 128)))
    return t


def _vmem_limit_stream(t, d, itemsize, budget):
    est = (2 * t * d * itemsize             # x tile, double-buffered
           + 2 * 8 * t * 4                  # (1, t) f32 score tile out (8-sublane pad), x2
           + 16 * t * 4                     # (16, t) f32 MXU output intermediate h
           + 2 * (16 * d * itemsize + 2 * 8 * 128 * 4)   # resident w1/b1/w2
           + (2 << 20))                     # slack for vregs / compiler temps
    return int(min(max(int(est * 1.25), 8 << 20), budget))


# --------------------------------------------------------------------------- #
# Wrapper
# --------------------------------------------------------------------------- #
@functools.partial(jax.jit, static_argnames=("tile_n", "fuse_max_bytes", "compute_dtype"))
def attention_layer(x, w1, b1, w2, b2=None, *,
                    tile_n=None, fuse_max_bytes=None, compute_dtype=None):
    """x: (..., D).  w1: (16, D), b1: (16,), w2: (1, 16); b2 unused (softmax-invariant).

    Returns softmax attention weights of shape (1, N) with N = prod(x.shape[:-1]),
    matching the PyTorch module's `softmax(out.view(1, -1), dim=1)`.
    Optional compute_dtype=jnp.bfloat16 streams x/w1 in bf16 (f32 accumulation kept).
    """
    d = x.shape[-1]
    x2 = x.reshape(-1, d)                   # flatten leading dims like .view(1, -1)
    n = x2.shape[0]

    if compute_dtype is not None:
        x2 = x2.astype(compute_dtype)
        w1 = w1.astype(compute_dtype)

    b1c = b1.reshape(16, 1).astype(jnp.float32)
    w2c = w2.reshape(16, 1).astype(jnp.float32)
    # b2 is dropped: softmax(scores + c) == softmax(scores).

    itemsize = jnp.dtype(x2.dtype).itemsize
    budget = _vmem_budget()

    # ---------------- Small-/medium-N fused fast path ---------------- #
    fuse_cap = (16 << 20) if fuse_max_bytes is None else int(fuse_max_bytes)
    fused_bytes = (n * d * itemsize            # whole x resident
                   + 24 * n * 4                # (16,n) h + (1,n) scores/out (padded)
                   + (16 * d + 64) * itemsize
                   + (1 << 20))
    if fused_bytes <= min(fuse_cap, budget):
        vmem_limit = int(min(max(2 * fused_bytes, 8 << 20), budget))
        return pl.pallas_call(
            _fused_kernel,
            out_shape=jax.ShapeDtypeStruct((1, n), jnp.float32),
            in_specs=[
                pl.BlockSpec((n, d), lambda: (0, 0)),   # whole x in VMEM
                pl.BlockSpec((16, d), lambda: (0, 0)),  # w1
                pl.BlockSpec((16, 1), lambda: (0, 0)),  # b1
                pl.BlockSpec((16, 1), lambda: (0, 0)),  # w2
            ],
            out_specs=pl.BlockSpec((1, n), lambda: (0, 0)),
            compiler_params=pltpu.CompilerParams(vmem_limit_bytes=vmem_limit),
        )(x2, w1, b1c, w2c)

    # ---------------- Large-N two-pass path ---------------- #
    t = _choose_tile(n, d, itemsize, budget, tile_n)
    num_tiles = pl.cdiv(n, t)                       # last block may be padded
    vmem_limit = _vmem_limit_stream(t, d, itemsize, budget)

    scores = pl.pallas_call(
        _scores_kernel,
        out_shape=jax.ShapeDtypeStruct((1, n), jnp.float32),
        grid=(num_tiles,),
        in_specs=[
            pl.BlockSpec((t, d), lambda i: (i, 0)),     # streamed x tile (double-buffered)
            pl.BlockSpec((16, d), lambda i: (0, 0)),    # resident w1
            pl.BlockSpec((16, 1), lambda i: (0, 0)),    # resident b1
            pl.BlockSpec((16, 1), lambda i: (0, 0)),    # resident w2
        ],
        out_specs=pl.BlockSpec((1, t), lambda i: (0, i)),
        compiler_params=pltpu.CompilerParams(
            dimension_semantics=("parallel",),
            vmem_limit_bytes=vmem_limit,
        ),
    )(x2, w1, b1c, w2c)

    # Global softmax over all N scores (tiny traffic: N * 4 bytes each way).
    sm_vmem = int(min(max(8 * n * 4 + (2 << 20), 8 << 20), budget))
    if n % 128 == 0 and n >= 1024:
        # Sublane-dense layout: 8x smaller VMEM footprint, full vreg density.
        rows = n // 128
        sm = pl.pallas_call(
            _softmax_dense_kernel,
            out_shape=jax.ShapeDtypeStruct((rows, 128), jnp.float32),
            in_specs=[pl.BlockSpec((rows, 128), lambda: (0, 0))],
            out_specs=pl.BlockSpec((rows, 128), lambda: (0, 0)),
            compiler_params=pltpu.CompilerParams(vmem_limit_bytes=sm_vmem),
        )(scores.reshape(rows, 128))
        return sm.reshape(1, n)

    # TODO(synk): for N beyond a few million that is not a multiple of 128, the
    # (1, N) single-block softmax below should be tiled (online max/sum pass).
    return pl.pallas_call(
        _softmax_row_kernel,
        out_shape=jax.ShapeDtypeStruct((1, n), jnp.float32),
        in_specs=[pl.BlockSpec((1, n), lambda: (0, 0))],
        out_specs=pl.BlockSpec((1, n), lambda: (0, 0)),
        compiler_params=pltpu.CompilerParams(vmem_limit_bytes=sm_vmem),
    )(scores)


def init_params(key, embedding_dim):
    """nn.Linear-style uniform(-1/sqrt(fan_in), 1/sqrt(fan_in)) init (PyTorch layout)."""
    k1, k2, k3, k4 = jax.random.split(key, 4)
    bound1 = 1.0 / jnp.sqrt(jnp.float32(embedding_dim))
    w1 = jax.random.uniform(k1, (16, embedding_dim), jnp.float32, -bound1, bound1)
    b1 = jax.random.uniform(k2, (16,), jnp.float32, -bound1, bound1)
    bound2 = 1.0 / jnp.sqrt(jnp.float32(16.0))
    w2 = jax.random.uniform(k3, (1, 16), jnp.float32, -bound2, bound2)
    b2 = jax.random.uniform(k4, (1,), jnp.float32, -bound2, bound2)
    return w1, b1, w2, b2


if __name__ == "__main__":
    key = jax.random.PRNGKey(0)

    def reference(x, w1, b1, w2, b2):
        h = jnp.maximum(x.reshape(-1, x.shape[-1]) @ w1.T + b1, 0.0)
        s = (h @ w2.T + b2).reshape(1, -1)
        return jax.nn.softmax(s, axis=1)

    # Case 1: small N -> fused single-kernel path (scores + softmax in VMEM).
    k1, k2 = jax.random.split(key)
    N1, D1 = 512, 128
    x1 = jax.random.normal(k1, (N1, D1), jnp.float32)
    w1a, b1a, w2a, b2a = init_params(k2, D1)
    out1 = jax.block_until_ready(attention_layer(x1, w1a, b1a, w2a, b2a))
    ref1 = reference(x1, w1a, b1a, w2a, b2a)
    assert out1.shape == (1, N1), f"bad shape {out1.shape}"
    assert jnp.allclose(out1, ref1, atol=1e-5), "fused path mismatch vs reference"

    # Case 2: forced streaming two-pass path; N is not a multiple of the tile
    # (exercises the cdiv/padded last block) nor of 128 (row-softmax fallback).
    k3, k4 = jax.random.split(k2)
    N2, D2 = 1000, 64
    x2 = jax.random.normal(k3, (N2, D2), jnp.float32)
    w1b, b1b, w2b, b2b = init_params(k4, D2)
    out2 = jax.block_until_ready(
        attention_layer(x2, w1b, b1b, w2b, b2b, fuse_max_bytes=0))
    ref2 = reference(x2, w1b, b1b, w2b, b2b)
    assert out2.shape == (1, N2), f"bad shape {out2.shape}"
    assert jnp.allclose(out2, ref2, atol=1e-5), "two-pass (padded) mismatch vs reference"

    # Case 3: forced two-pass path with N % 128 == 0 -> sublane-dense softmax pass.
    k5, k6 = jax.random.split(k4)
    N3, D3 = 1024, 128
    x3 = jax.random.normal(k5, (N3, D3), jnp.float32)
    w1c, b1c, w2c, b2c = init_params(k6, D3)
    out3 = jax.block_until_ready(
        attention_layer(x3, w1c, b1c, w2c, b2c, fuse_max_bytes=0))
    ref3 = reference(x3, w1c, b1c, w2c, b2c)
    assert out3.shape == (1, N3), f"bad shape {out3.shape}"
    assert jnp.allclose(out3, ref3, atol=1e-5), "two-pass (dense softmax) mismatch vs reference"

    print("KERNEL_OK")
</pallas_src>

<mosaic_0001>
module attributes {stable_mosaic.version = 11 : i64} {
  func.func @_fused_kernel(%arg0: memref<512x128xf32, #tpu.memory_space<vmem>>, %arg1: memref<16x128xf32, #tpu.memory_space<vmem>>, %arg2: memref<16x1xf32, #tpu.memory_space<vmem>>, %arg3: memref<16x1xf32, #tpu.memory_space<vmem>>, %arg4: memref<1x512xf32, #tpu.memory_space<vmem>>) attributes {dimension_semantics = [], scalar_prefetch = 0 : i64, scratch_operands = 0 : i64, tpu.core_type = #tpu.core_type<tc>} {
    %c0 = arith.constant 0 : index
    %c0_0 = arith.constant 0 : index
    %0 = vector.load %arg1[%c0, %c0_0] : memref<16x128xf32, #tpu.memory_space<vmem>>, vector<16x128xf32>
    %c0_1 = arith.constant 0 : index
    %c0_2 = arith.constant 0 : index
    %1 = vector.load %arg0[%c0_1, %c0_2] : memref<512x128xf32, #tpu.memory_space<vmem>>, vector<512x128xf32>
    %cst = arith.constant dense<0.000000e+00> : vector<16x512xf32>
    %2 = tpu.matmul %0, %1, %cst {dimension_numbers = #tpu.dot_dimension_numbers<[1], [1], [0], [0], [0, 0, 1, 0], [], []>} : vector<16x128xf32>, vector<512x128xf32>, vector<16x512xf32> -> vector<16x512xf32>
    %c0_3 = arith.constant 0 : index
    %c0_4 = arith.constant 0 : index
    %3 = vector.load %arg2[%c0_3, %c0_4] : memref<16x1xf32, #tpu.memory_space<vmem>>, vector<16x1xf32>
    %4 = vector.broadcast %3 : vector<16x1xf32> to vector<16x512xf32>
    %5 = arith.addf %2, %4 : vector<16x512xf32>
    %cst_5 = arith.constant 0.000000e+00 : f32
    %6 = vector.broadcast %cst_5 : f32 to vector<16x512xf32>
    %7 = arith.maximumf %5, %6 : vector<16x512xf32>
    %c0_6 = arith.constant 0 : index
    %c0_7 = arith.constant 0 : index
    %8 = vector.load %arg3[%c0_6, %c0_7] : memref<16x1xf32, #tpu.memory_space<vmem>>, vector<16x1xf32>
    %9 = vector.broadcast %8 : vector<16x1xf32> to vector<16x512xf32>
    %10 = arith.mulf %7, %9 : vector<16x512xf32>
    %cst_8 = arith.constant dense<0.000000e+00> : vector<512xf32>
    %11 = vector.multi_reduction <add>, %10, %cst_8 [0] : vector<16x512xf32> to vector<512xf32>
    %12 = vector.shape_cast %11 : vector<512xf32> to vector<1x512xf32>
    %cst_9 = arith.constant dense<0xFF800000> : vector<1xf32>
    %13 = vector.multi_reduction <maximumf>, %12, %cst_9 [1] : vector<1x512xf32> to vector<1xf32>
    %14 = vector.shape_cast %13 : vector<1xf32> to vector<1x1xf32>
    %15 = vector.broadcast %14 : vector<1x1xf32> to vector<1x512xf32>
    %16 = arith.subf %12, %15 : vector<1x512xf32>
    %17 = math.exp %16 : vector<1x512xf32>
    %cst_10 = arith.constant dense<0.000000e+00> : vector<1xf32>
    %18 = vector.multi_reduction <add>, %17, %cst_10 [1] : vector<1x512xf32> to vector<1xf32>
    %19 = vector.shape_cast %18 : vector<1xf32> to vector<1x1xf32>
    %20 = tpu.reciprocal %19 : vector<1x1xf32> -> vector<1x1xf32>
    %21 = vector.broadcast %20 : vector<1x1xf32> to vector<1x512xf32>
    %22 = arith.mulf %17, %21 : vector<1x512xf32>
    %c0_11 = arith.constant 0 : index
    %c0_12 = arith.constant 0 : index
    %23 = vector.load %arg4[%c0_11, %c0_12] : memref<1x512xf32, #tpu.memory_space<vmem>>, vector<1x512xf32>
    tpu.vector_store %arg4[%c0_11, %c0_12], %22 {strides = array<i32>} : memref<1x512xf32, #tpu.memory_space<vmem>>, vector<1x512xf32>,
    return
  }
}

</mosaic_0001>

<llo_original>
// kernel: attention_layer.1
$region0: #{attention_layer.1}
  #allocation0 [shape = 'u32[]', space=smem, size = 0x4, offset = 0x4, fixed_abs, tag = 'smem constant byte address 0x4 - core index']
  #allocation1 [shape = 'u32[72,128]{1,0:T(1,128)}', space=vmem, size = 0x9000, scoped, tag = 'internal scratch']
  %s0 = inlined_call_operand.hbm [shape: f32[512,128], index: 0, kind: input, shape index: {}]
  %s1 = inlined_call_operand.vmem [shape: f32[16,128], index: 1, kind: input, shape index: {}]
  %s2 = inlined_call_operand.vmem [shape: f32[16,1], index: 2, kind: input, shape index: {}]
  %s3 = inlined_call_operand.vmem [shape: f32[16,1], index: 3, kind: input, shape index: {}]
  %s4 = inlined_call_operand.hbm [shape: f32[1,512], index: 4, kind: output, shape index: {}]
  %s5 = sld [smem:[#allocation0]]
  $region30: #{attention_layer.1} parent=0
    _
  %s7 = ssub.s32 1, %s5
  %s8 = scalar_select 0, %s7, %s5
  $region1: #{attention_layer.1} parent=0
    #allocation2 [shape = 'u8[262144]{0}', space=vmem, size = 0x40000, scoped, tag = 'input window, operand 0, single buffered']
    #allocation3 [shape = 's32[1]{0}', space=sflag, size = 0x4, scoped, tag = 'scoped memory for attention_layer.1']
    #allocation4 [shape = 's32[1]{0}', space=sflag, size = 0x4, scoped, tag = 'scoped memory for attention_layer.1']
    #allocation5 [shape = 'u8[2048]{0}', space=vmem, size = 0x800, scoped, tag = 'output window, operand 0, single buffered']
    %9 = vsyncpa [#allocation3], 0
    %10 = vsyncpa [#allocation4], 0
    // Predicated region
    $region2: #{attention_layer.1} parent=1 // pred_check
      _
    $region3: #{attention_layer.1} parent=1 // pred_check_branch
      %12 = sbr.rel (0) target = $region5
    $region4: #{attention_layer.1} parent=1 // pred_region
      %14 = vsyncadd [#allocation3], 0
      %s15 = sshll.u32 %s0, 4
      %s16 = int_to_ptr.hbm [resolvable:$true] %s15
      %s17 = sshll.u32 [#allocation2], 4
      %s18 = int_to_ptr.vmem [resolvable:$true] %s17
      %23 = dma.hbm_to_vmem [thread:$0]  %s16, 8192, %s18, [#allocation3], 128, 128, 8
    $region5: #{attention_layer.1} parent=1 // pred_fallthru
      _
    // Predicated region
    $region6: #{attention_layer.1} parent=1 // pred_check
      _
    $region7: #{attention_layer.1} parent=1 // pred_check_branch
      %25 = sbr.rel (0) target = $region9
    $region8: #{attention_layer.1} parent=1 // pred_region
      _
    $region9: #{attention_layer.1} parent=1 // pred_fallthru
      _
    // Predicated region
    $region10: #{attention_layer.1} parent=1 // pred_check
      _
    $region11: #{attention_layer.1} parent=1 // pred_check_branch
      %27 = sbr.rel (0) target = $region13
    $region12: #{attention_layer.1} parent=1 // pred_region
      _
    $region13: #{attention_layer.1} parent=1 // pred_fallthru
      _
    // Predicated region
    $region14: #{attention_layer.1} parent=1 // pred_check
      _
    $region15: #{attention_layer.1} parent=1 // pred_check_branch
      %29 = sbr.rel (0) target = $region17
    $region16: #{attention_layer.1} parent=1 // pred_region
      _
    $region17: #{attention_layer.1} parent=1 // pred_fallthru
      _
    // Predicated region
    $region18: #{attention_layer.1} parent=1 // pred_check
      _
    $region19: #{attention_layer.1} parent=1 // pred_check_branch
      %31 = sbr.rel (0) target = $region21
    $region20: #{attention_layer.1} parent=1 // pred_region
      %33 = dma.done [#allocation3], 8192
    $region21: #{attention_layer.1} parent=1 // pred_fallthru
      _
    %v34 = vld [vmem:[%s1] sm:$0xff]
    %v35 = vld [vmem:[%s1 + $0x8] sm:$0xff]
    %v36 = vld [vmem:[#allocation2] sm:$0xff]
    %v37 = vld [vmem:[#allocation2 + $0x8] sm:$0xff]
    %v38 = vld [vmem:[#allocation2 + $0x10] sm:$0xff]
    %v39 = vld [vmem:[#allocation2 + $0x18] sm:$0xff]
    %v40 = vld [vmem:[#allocation2 + $0x20] sm:$0xff]
    %v41 = vld [vmem:[#allocation2 + $0x28] sm:$0xff]
    %v42 = vld [vmem:[#allocation2 + $0x30] sm:$0xff]
    %v43 = vld [vmem:[#allocation2 + $0x38] sm:$0xff]
    %v44 = vld [vmem:[#allocation2 + $0x40] sm:$0xff]
    %v45 = vld [vmem:[#allocation2 + $0x48] sm:$0xff]
    %v46 = vld [vmem:[#allocation2 + $0x50] sm:$0xff]
    %v47 = vld [vmem:[#allocation2 + $0x58] sm:$0xff]
    %v48 = vld [vmem:[#allocation2 + $0x60] sm:$0xff]
    %v49 = vld [vmem:[#allocation2 + $0x68] sm:$0xff]
    %v50 = vld [vmem:[#allocation2 + $0x70] sm:$0xff]
    %v51 = vld [vmem:[#allocation2 + $0x78] sm:$0xff]
    %v52 = vld [vmem:[#allocation2 + $0x80] sm:$0xff]
    %v53 = vld [vmem:[#allocation2 + $0x88] sm:$0xff]
    %v54 = vld [vmem:[#allocation2 + $0x90] sm:$0xff]
    %v55 = vld [vmem:[#allocation2 + $0x98] sm:$0xff]
    %v56 = vld [vmem:[#allocation2 + $0xa0] sm:$0xff]
    %v57 = vld [vmem:[#allocation2 + $0xa8] sm:$0xff]
    %v58 = vld [vmem:[#allocation2 + $0xb0] sm:$0xff]
    %v59 = vld [vmem:[#allocation2 + $0xb8] sm:$0xff]
    %v60 = vld [vmem:[#allocation2 + $0xc0] sm:$0xff]
    %v61 = vld [vmem:[#allocation2 + $0xc8] sm:$0xff]
    %v62 = vld [vmem:[#allocation2 + $0xd0] sm:$0xff]
    %v63 = vld [vmem:[#allocation2 + $0xd8] sm:$0xff]
    %v64 = vld [vmem:[#allocation2 + $0xe0] sm:$0xff]
    %v65 = vld [vmem:[#allocation2 + $0xe8] sm:$0xff]
    %v66 = vld [vmem:[#allocation2 + $0xf0] sm:$0xff]
    %v67 = vld [vmem:[#allocation2 + $0xf8] sm:$0xff]
    %v68 = vld [vmem:[#allocation2 + $0x100] sm:$0xff]
    %v69 = vld [vmem:[#allocation2 + $0x108] sm:$0xff]
    %v70 = vld [vmem:[#allocation2 + $0x110] sm:$0xff]
    %v71 = vld [vmem:[#allocation2 + $0x118] sm:$0xff]
    %v72 = vld [vmem:[#allocation2 + $0x120] sm:$0xff]
    %v73 = vld [vmem:[#allocation2 + $0x128] sm:$0xff]
    %v74 = vld [vmem:[#allocation2 + $0x130] sm:$0xff]
    %v75 = vld [vmem:[#allocation2 + $0x138] sm:$0xff]
    %v76 = vld [vmem:[#allocation2 + $0x140] sm:$0xff]
    %v77 = vld [vmem:[#allocation2 + $0x148] sm:$0xff]
    %v78 = vld [vmem:[#allocation2 + $0x150] sm:$0xff]
    %v79 = vld [vmem:[#allocation2 + $0x158] sm:$0xff]
    %v80 = vld [vmem:[#allocation2 + $0x160] sm:$0xff]
    %v81 = vld [vmem:[#allocation2 + $0x168] sm:$0xff]
    %v82 = vld [vmem:[#allocation2 + $0x170] sm:$0xff]
    %v83 = vld [vmem:[#allocation2 + $0x178] sm:$0xff]
    %v84 = vld [vmem:[#allocation2 + $0x180] sm:$0xff]
    %v85 = vld [vmem:[#allocation2 + $0x188] sm:$0xff]
    %v86 = vld [vmem:[#allocation2 + $0x190] sm:$0xff]
    %v87 = vld [vmem:[#allocation2 + $0x198] sm:$0xff]
    %v88 = vld [vmem:[#allocation2 + $0x1a0] sm:$0xff]
    %v89 = vld [vmem:[#allocation2 + $0x1a8] sm:$0xff]
    %v90 = vld [vmem:[#allocation2 + $0x1b0] sm:$0xff]
    %v91 = vld [vmem:[#allocation2 + $0x1b8] sm:$0xff]
    %v92 = vld [vmem:[#allocation2 + $0x1c0] sm:$0xff]
    %v93 = vld [vmem:[#allocation2 + $0x1c8] sm:$0xff]
    %v94 = vld [vmem:[#allocation2 + $0x1d0] sm:$0xff]
    %v95 = vld [vmem:[#allocation2 + $0x1d8] sm:$0xff]
    %v96 = vld [vmem:[#allocation2 + $0x1e0] sm:$0xff]
    %v97 = vld [vmem:[#allocation2 + $0x1e8] sm:$0xff]
    %v98 = vld [vmem:[#allocation2 + $0x1f0] sm:$0xff]
    %v99 = vld [vmem:[#allocation2 + $0x1f8] sm:$0xff]
    %v100 = vld [vmem:[%s2] sm:$0xff]
    %v101 = vld [vmem:[%s2 + $0x8] sm:$0xff]
    %103 = vset.pattern.permute.xlu0 0
    %104 = vperm.xlu0 %103, %v100
    %v105 = vpop.permute.xlu0 %104
    %108 = vset.pattern.permute.xlu0 0
    %109 = vperm.xlu0 %108, %v101
    %v110 = vpop.permute.xlu0 %109
    %112 = vmatpush.xpose.msra.mxu0 %v51
    %113 = vmatpush.xpose.msra.mxu0 %v50
    %114 = vmatpush.xpose.msra.mxu0 %v49
    %115 = vmatpush.xpose.msra.mxu0 %v48
    %116 = vmatpush.xpose.msra.mxu0 %v47
    %117 = vmatpush.xpose.msra.mxu0 %v46
    %118 = vmatpush.xpose.msra.mxu0 %v45
    %119 = vmatpush.xpose.msra.mxu0 %v44
    %120 = vmatpush.xpose.msra.mxu0 %v43
    %121 = vmatpush.xpose.msra.mxu0 %v42
    %122 = vmatpush.xpose.msra.mxu0 %v41
    %123 = vmatpush.xpose.msra.mxu0 %v40
    %124 = vmatpush.xpose.msra.mxu0 %v39
    %125 = vmatpush.xpose.msra.mxu0 %v38
    %126 = vmatpush.xpose.msra.mxu0 %v37
    %127 = vmatpush.xpose.msra.mxu0 %v36
    %128 = vmatmul.f32.gmra.mxu0 %v34
    %v129 = vpop.f32.mrf.mxu0
    %v130 = vadd.f32 %v105, %v129
    %131 = vmatmul.f32.gmra.mxu0 %v35
    %v132 = vpop.f32.mrf.mxu0
    %v133 = vadd.f32 %v110, %v132
    %134 = vdwg.mxu0
    %135 = vmatpush.xpose.msra.mxu0 %v67
    %136 = vmatpush.xpose.msra.mxu0 %v66
    %137 = vmatpush.xpose.msra.mxu0 %v65
    %138 = vmatpush.xpose.msra.mxu0 %v64
    %139 = vmatpush.xpose.msra.mxu0 %v63
    %140 = vmatpush.xpose.msra.mxu0 %v62
    %141 = vmatpush.xpose.msra.mxu0 %v61
    %142 = vmatpush.xpose.msra.mxu0 %v60
    %143 = vmatpush.xpose.msra.mxu0 %v59
    %144 = vmatpush.xpose.msra.mxu0 %v58
    %145 = vmatpush.xpose.msra.mxu0 %v57
    %146 = vmatpush.xpose.msra.mxu0 %v56
    %147 = vmatpush.xpose.msra.mxu0 %v55
    %148 = vmatpush.xpose.msra.mxu0 %v54
    %149 = vmatpush.xpose.msra.mxu0 %v53
    %150 = vmatpush.xpose.msra.mxu0 %v52
    %151 = vmatmul.f32.gmra.mxu0 %v34
    %v152 = vpop.f32.mrf.mxu0
    %v153 = vadd.f32 %v105, %v152
    %154 = vmatmul.f32.gmra.mxu0 %v35
    %v155 = vpop.f32.mrf.mxu0
    %v156 = vadd.f32 %v110, %v155
    %157 = vdwg.mxu0
    %158 = vmatpush.xpose.msra.mxu0 %v83
    %159 = vmatpush.xpose.msra.mxu0 %v82
    %160 = vmatpush.xpose.msra.mxu0 %v81
    %161 = vmatpush.xpose.msra.mxu0 %v80
    %162 = vmatpush.xpose.msra.mxu0 %v79
    %163 = vmatpush.xpose.msra.mxu0 %v78
    %164 = vmatpush.xpose.msra.mxu0 %v77
    %165 = vmatpush.xpose.msra.mxu0 %v76
    %166 = vmatpush.xpose.msra.mxu0 %v75
    %167 = vmatpush.xpose.msra.mxu0 %v74
    %168 = vmatpush.xpose.msra.mxu0 %v73
    %169 = vmatpush.xpose.msra.mxu0 %v72
    %170 = vmatpush.xpose.msra.mxu0 %v71
    %171 = vmatpush.xpose.msra.mxu0 %v70
    %172 = vmatpush.xpose.msra.mxu0 %v69
    %173 = vmatpush.xpose.msra.mxu0 %v68
    %174 = vmatmul.f32.gmra.mxu0 %v34
    %v175 = vpop.f32.mrf.mxu0
    %v176 = vadd.f32 %v105, %v175
    %177 = vmatmul.f32.gmra.mxu0 %v35
    %v178 = vpop.f32.mrf.mxu0
    %v179 = vadd.f32 %v110, %v178
    %180 = vdwg.mxu0
    %181 = vmatpush.xpose.msra.mxu0 %v99
    %182 = vmatpush.xpose.msra.mxu0 %v98
    %183 = vmatpush.xpose.msra.mxu0 %v97
    %184 = vmatpush.xpose.msra.mxu0 %v96
    %185 = vmatpush.xpose.msra.mxu0 %v95
    %186 = vmatpush.xpose.msra.mxu0 %v94
    %187 = vmatpush.xpose.msra.mxu0 %v93
    %188 = vmatpush.xpose.msra.mxu0 %v92
    %189 = vmatpush.xpose.msra.mxu0 %v91
    %190 = vmatpush.xpose.msra.mxu0 %v90
    %191 = vmatpush.xpose.msra.mxu0 %v89
    %192 = vmatpush.xpose.msra.mxu0 %v88
    %193 = vmatpush.xpose.msra.mxu0 %v87
    %194 = vmatpush.xpose.msra.mxu0 %v86
    %195 = vmatpush.xpose.msra.mxu0 %v85
    %196 = vmatpush.xpose.msra.mxu0 %v84
    %197 = vmatmul.f32.gmra.mxu0 %v34
    %v198 = vpop.f32.mrf.mxu0
    %v199 = vadd.f32 %v105, %v198
    %200 = vmatmul.f32.gmra.mxu0 %v35
    %v201 = vpop.f32.mrf.mxu0
    %v202 = vadd.f32 %v110, %v201
    %203 = vdwg.mxu0
    %v204 = vmax.f32 %v130, 0.0
    %v205 = vmax.f32 %v153, 0.0
    %v206 = vmax.f32 %v176, 0.0
    %v207 = vmax.f32 %v199, 0.0
    %v208 = vmax.f32 %v133, 0.0
    %v209 = vmax.f32 %v156, 0.0
    %v210 = vmax.f32 %v179, 0.0
    %v211 = vmax.f32 %v202, 0.0
    %v212 = vld [vmem:[%s3] sm:$0xff]
    %v213 = vld [vmem:[%s3 + $0x8] sm:$0xff]
    %215 = vset.pattern.permute.xlu0 0
    %216 = vperm.xlu0 %215, %v212
    %v217 = vpop.permute.xlu0 %216
    %220 = vset.pattern.permute.xlu0 0
    %221 = vperm.xlu0 %220, %v213
    %v222 = vpop.permute.xlu0 %221
    %v224 = vmul.f32 %v204, %v217
    %v225 = vmul.f32 %v205, %v217
    %v226 = vmul.f32 %v206, %v217
    %v227 = vmul.f32 %v207, %v217
    %v228 = vmul.f32 %v208, %v222
    %v229 = vmul.f32 %v209, %v222
    %v230 = vmul.f32 %v210, %v222
    %v231 = vmul.f32 %v211, %v222
    %v232 = vadd.f32 %v224, %v228
    %v233 = vrot.slane %v232, 4
    %v234 = vadd.f32 %v232, %v233
    %v235 = vrot.slane %v234, 2
    %v236 = vadd.f32 %v234, %v235
    %v237 = vrot.slane %v236, 1
    %v238 = vadd.f32 %v236, %v237
    %v239 = vadd.f32 %v225, %v229
    %v240 = vrot.slane %v239, 4
    %v241 = vadd.f32 %v239, %v240
    %v242 = vrot.slane %v241, 2
    %v243 = vadd.f32 %v241, %v242
    %v244 = vrot.slane %v243, 1
    %v245 = vadd.f32 %v243, %v244
    %v246 = vadd.f32 %v226, %v230
    %v247 = vrot.slane %v246, 4
    %v248 = vadd.f32 %v246, %v247
    %v249 = vrot.slane %v248, 2
    %v250 = vadd.f32 %v248, %v249
    %v251 = vrot.slane %v250, 1
    %v252 = vadd.f32 %v250, %v251
    %v253 = vadd.f32 %v227, %v231
    %v254 = vrot.slane %v253, 4
    %v255 = vadd.f32 %v253, %v254
    %v256 = vrot.slane %v255, 2
    %v257 = vadd.f32 %v255, %v256
    %v258 = vrot.slane %v257, 1
    %v259 = vadd.f32 %v257, %v258
    %v260 = vmax.f32 %v238, %v245
    %v261 = vmax.f32 %v252, %v259
    %v262 = vmax.f32 %v260, %v261
    %263 = vmax.xlane.f32.xlu0 %v262
    %v264 = vpop.xlane.xlu0 %263
    %v265 = vsub.f32 %v238, %v264
    %v266 = vsub.f32 %v245, %v264
    %v267 = vsub.f32 %v252, %v264
    %v268 = vsub.f32 %v259, %v264
    %v269 = vmul.f32 %v265, 1.442695
    %v270 = vpow.pop %v269
    %v271 = vmul.f32 %v266, 1.442695
    %v272 = vpow.pop %v271
    %v273 = vmul.f32 %v267, 1.442695
    %v274 = vpow.pop %v273
    %v275 = vmul.f32 %v268, 1.442695
    %v276 = vpow.pop %v275
    %v277 = vadd.f32 %v270, %v272
    %v278 = vadd.f32 %v277, %v274
    %v279 = vadd.f32 %v278, %v276
    %280 = vadd.xlane.f32.xlu0 %v279
    %v281 = vpop.xlane.xlu0 %280
    %v282 = vrcp.pop %v281
    %v283 = vmul.f32 %v281, %v282
    %v284 = vsub.f32 1.0, %v283
    %v285 = vmul.f32 %v282, %v284
    %v286 = vadd.f32 %v282, %v285
    %vm287 = vweird.f32 %v281
    %vm288 = vweird.f32 %v282
    %vm289 = vmor %vm287, %vm288
    %v290 = vsel %vm289, %v282, %v286
    %v291 = vand.u32 2147483647, %v281
    %vm292 = vcmp.eq.f32.partialorder %v291, 8.507059e+37
    %v293 = vand.u32 %v281, 2147483648
    %v294 = vor.u32 1.1754944e-38, %v293
    %v295 = vsel %vm292, %v294, %v290
    %v296 = vmul.f32 %v270, %v295
    %v297 = vmul.f32 %v272, %v295
    %v298 = vmul.f32 %v274, %v295
    %v299 = vmul.f32 %v276, %v295
    %v304 = vrot.slane %v297, 7
    %v305 = vrot.slane %v298, 6
    %v306 = vrot.slane %v299, 5
    %vm307 = vcmask 1040384
    %v308 = vsel %vm307, %v296, %v304
    %vm309 = vcmask 1042434
    %v310 = vsel %vm309, %v305, %v306
    %vm311 = vcmask 1041408
    %v312 = vsel %vm311, %v308, %v310
    %v314 = vlaneseq
    %vm315 = vcmp.ge.s32.totalorder %v314, 0
    %vm316 = vcmp.lt.s32.totalorder %v314, 512
    %vm317 = vmand %vm315, %vm316
    %318 = vst.msk [vmem:[#allocation5] sm:$0xf] %vm317, %v312
    // Predicated region
    $region22: #{attention_layer.1} parent=1 // pred_check
      _
    $region23: #{attention_layer.1} parent=1 // pred_check_branch
      %320 = sbr.rel (0) target = $region25
    $region24: #{attention_layer.1} parent=1 // pred_region
      %322 = vsyncadd [#allocation4], 0
      %s324 = sshll.u32 [#allocation5], 4
      %s325 = int_to_ptr.vmem [resolvable:$true] %s324
      %s326 = sshll.u32 %s4, 4
      %s327 = int_to_ptr.hbm [resolvable:$true] %s326
      %329 = dma.vmem_to_hbm [thread:$0]  %s325, 64, %s327, [#allocation4]
    $region25: #{attention_layer.1} parent=1 // pred_fallthru
      _
    // Predicated region
    $region26: #{attention_layer.1} parent=1 // pred_check
      _
    $region27: #{attention_layer.1} parent=1 // pred_check_branch
      %331 = sbr.rel (0) target = $region29
    $region28: #{attention_layer.1} parent=1 // pred_region
      %333 = dma.done [#allocation4], 64
    $region29: #{attention_layer.1} parent=1 // pred_fallthru
      _
    %334 = vsyncpa [#allocation3], 1
    %335 = vsyncpa [#allocation4], 1

</llo_original>
